<compile_context>
chip_gen: v7x
topology: tpu7x:2x2x1
jax: 0.10.0
libtpu: 0.0.40
codegen_flags: <defaults>
</compile_context>

<pallas_src>
import jax
import jax.numpy as jnp
from jax.experimental import pallas as pl
from jax.experimental.pallas import tpu as pltpu


def _shifts_mse_kernel(inp_ref, tgt_ref, sum_ref, cnt_ref):
    TB, C, TS = tgt_ref.shape

    tgt = tgt_ref[...].astype(jnp.float32)   # (TB, C, TS)
    inp = inp_ref[...].astype(jnp.float32)   # (TB, C, TS)

    mask_f = (tgt[:, 0, :] != 0.0).astype(jnp.float32)      # (TB, TS)
    diff = tgt[:, 1:, :] - inp[:, 1:, :]                     # (TB, C-1, TS)
    sq_over_c = jnp.sum(diff * diff, axis=1)                 # (TB, TS)
    contrib = mask_f * sq_over_c                             # (TB, TS)

    if TS % 128 == 0:
        # Keep the lane axis: reduce only over batch/sublane groups (VPU adds),
        # leaving a (1,1,128) lane-partial; the cross-lane sum happens in the
        # wrapper over a tiny array.
        lane_sum = jnp.sum(contrib.reshape(TB, TS // 128, 128),
                           axis=(0, 1), keepdims=True)       # (1, 1, 128) f32
        lane_cnt = jnp.sum(mask_f.reshape(TB, TS // 128, 128),
                           axis=(0, 1), keepdims=True)       # (1, 1, 128) f32 (exact ints)
        sum_ref[...] = lane_sum.reshape(1, 1, 1, 128)
        cnt_ref[...] = lane_cnt.astype(jnp.int32).reshape(1, 1, 1, 128)
    else:
        # Unaligned spatial extent: fall back to a per-block scalar partial,
        # stored in lane 0 of the lane-dense output block.
        lane = jax.lax.broadcasted_iota(jnp.int32, (1, 1, 1, 128), 3)
        total_sum = jnp.sum(contrib)
        total_cnt = jnp.sum(mask_f).astype(jnp.int32)
        sum_ref[...] = jnp.where(lane == 0, total_sum, jnp.float32(0.0))
        cnt_ref[...] = jnp.where(lane == 0, total_cnt, jnp.int32(0))


def _choose_tiles(B, C, S, itemsize, target_block_bytes):
    """Pick (TB, TS): TS divides S and is a multiple of 128 (or TS == S);
    TB divides B; per-input block ~<= target_block_bytes."""
    per_pos_bytes = C * itemsize
    if S % 128 != 0:
        TS = S  # must take the full (unaligned) spatial dim as one block
    else:
        budget_elems = max(128, target_block_bytes // per_pos_bytes)
        t = min(S, (budget_elems // 128) * 128)
        TS = None
        while t >= 128:
            if S % t == 0:
                TS = t
                break
            t -= 128
        if TS is None:
            TS = S
    per_sample_bytes = per_pos_bytes * TS
    TB = max(1, min(B, target_block_bytes // max(1, per_sample_bytes)))
    while B % TB != 0:
        TB -= 1
    return TB, TS


def shifts_mse_loss(inputs, target, *, target_block_bytes=2 << 20):
    """inputs, target: (B, C, H, W) float (f32 or bf16). Returns scalar f32 loss."""
    B, C, H, W = inputs.shape
    assert target.shape == inputs.shape
    S = H * W

    # Free reshape for contiguous NCHW -> lane-dense (B, C, H*W).
    x = inputs.reshape(B, C, S)
    t = target.reshape(B, C, S)

    itemsize = max(inputs.dtype.itemsize, target.dtype.itemsize)
    TB, TS = _choose_tiles(B, C, S, itemsize, target_block_bytes)
    Gb, Gs = B // TB, S // TS

    partial_sum, partial_cnt = pl.pallas_call(
        _shifts_mse_kernel,
        out_shape=(
            jax.ShapeDtypeStruct((Gb, Gs, 1, 128), jnp.float32),
            jax.ShapeDtypeStruct((Gb, Gs, 1, 128), jnp.int32),
        ),
        grid_spec=pltpu.PrefetchScalarGridSpec(
            num_scalar_prefetch=0,
            grid=(Gb, Gs),
            in_specs=[
                pl.BlockSpec((TB, C, TS), lambda i, j: (i, 0, j)),
                pl.BlockSpec((TB, C, TS), lambda i, j: (i, 0, j)),
            ],
            out_specs=[
                pl.BlockSpec((1, 1, 1, 128), lambda i, j: (i, j, 0, 0)),
                pl.BlockSpec((1, 1, 1, 128), lambda i, j: (i, j, 0, 0)),
            ],
        ),
        compiler_params=pltpu.CompilerParams(
            # Each block writes its own output block -> both axes are parallel
            # (v7x shards the grid across both TensorCores; no-op on v5e/v6e).
            dimension_semantics=("parallel", "parallel"),
            vmem_limit_bytes=32 * 1024 * 1024,
        ),
    )(x, t)

    total = jnp.sum(partial_sum)
    count = jnp.sum(partial_cnt).astype(jnp.float32)   # exact int accumulation
    # N == 0 -> 0/0 = NaN, same behavior as the PyTorch module.
    return total / (count * jnp.float32(C - 1))


def _reference(inputs, target):
    mask = target[:, 0] != 0.0
    diff = (target[:, 1:] - inputs[:, 1:]).astype(jnp.float32)
    sq = jnp.sum(diff * diff, axis=1)                 # (B, H, W)
    masked_sum = jnp.sum(jnp.where(mask, sq, 0.0))
    n = jnp.sum(mask.astype(jnp.float32)) * (target.shape[1] - 1)
    return masked_sum / n


if __name__ == "__main__":
    key = jax.random.PRNGKey(0)
    k1, k2, k3 = jax.random.split(key, 3)

    B, C, H, W = 2, 4, 16, 16   # channel 0 = presence mask, channels 1..3 = shifts

    inputs = jax.random.normal(k1, (B, C, H, W), dtype=jnp.float32)

    presence = (jax.random.uniform(k2, (B, 1, H, W)) > 0.7).astype(jnp.float32)
    true_shifts = jax.random.normal(k3, (B, C - 1, H, W), dtype=jnp.float32)
    target = jnp.concatenate([presence, true_shifts], axis=1)

    loss = shifts_mse_loss(inputs, target)
    loss = jax.block_until_ready(loss)

    ref = jax.block_until_ready(_reference(inputs, target))
    assert jnp.allclose(loss, ref, rtol=1e-5, atol=1e-6), (loss, ref)

    print("KERNEL_OK")
</pallas_src>

<mosaic_0001>
module attributes {stable_mosaic.version = 11 : i64} {
  func.func @_shifts_mse_kernel(%arg0: i32, %arg1: i32, %arg2: memref<2x4x256xf32, #tpu.memory_space<vmem>>, %arg3: memref<2x4x256xf32, #tpu.memory_space<vmem>>, %arg4: memref<1x1x1x128xf32, #tpu.memory_space<vmem>>, %arg5: memref<1x1x1x128xi32, #tpu.memory_space<vmem>>) attributes {dimension_semantics = [#tpu.dimension_semantics<parallel>, #tpu.dimension_semantics<parallel>], iteration_bounds = array<i64: 1, 1>, scalar_prefetch = 0 : i64, scratch_operands = 0 : i64, tpu.core_type = #tpu.core_type<tc>, window_params = [{transform_indices = @transform_0, window_bounds = array<i64: 2, 4, 256>}, {transform_indices = @transform_1, window_bounds = array<i64: 2, 4, 256>}, {transform_indices = @transform_2, window_bounds = array<i64: 1, 1, 1, 128>}, {transform_indices = @transform_3, window_bounds = array<i64: 1, 1, 1, 128>}]} {
    %c0 = arith.constant 0 : index
    %c0_0 = arith.constant 0 : index
    %c0_1 = arith.constant 0 : index
    %0 = vector.load %arg3[%c0, %c0_0, %c0_1] : memref<2x4x256xf32, #tpu.memory_space<vmem>>, vector<2x4x256xf32>
    %c0_2 = arith.constant 0 : index
    %c0_3 = arith.constant 0 : index
    %c0_4 = arith.constant 0 : index
    %1 = vector.load %arg2[%c0_2, %c0_3, %c0_4] : memref<2x4x256xf32, #tpu.memory_space<vmem>>, vector<2x4x256xf32>
    %2 = vector.extract_strided_slice %0 {offsets = [0, 0, 0], sizes = [2, 1, 256], strides = [1, 1, 1]} : vector<2x4x256xf32> to vector<2x1x256xf32>
    %3 = vector.shape_cast %2 : vector<2x1x256xf32> to vector<2x256xf32>
    %cst = arith.constant 0.000000e+00 : f32
    %4 = vector.broadcast %cst : f32 to vector<2x256xf32>
    %5 = arith.cmpf one, %3, %4 : vector<2x256xf32>
    %6 = arith.extui %5 : vector<2x256xi1> to vector<2x256xi32>
    %7 = arith.sitofp %6 : vector<2x256xi32> to vector<2x256xf32>
    %8 = vector.extract_strided_slice %0 {offsets = [0, 1, 0], sizes = [2, 3, 256], strides = [1, 1, 1]} : vector<2x4x256xf32> to vector<2x3x256xf32>
    %9 = vector.extract_strided_slice %1 {offsets = [0, 1, 0], sizes = [2, 3, 256], strides = [1, 1, 1]} : vector<2x4x256xf32> to vector<2x3x256xf32>
    %10 = arith.subf %8, %9 : vector<2x3x256xf32>
    %11 = arith.mulf %10, %10 : vector<2x3x256xf32>
    %cst_5 = arith.constant dense<0.000000e+00> : vector<2x256xf32>
    %12 = vector.multi_reduction <add>, %11, %cst_5 [1] : vector<2x3x256xf32> to vector<2x256xf32>
    %13 = arith.mulf %7, %12 : vector<2x256xf32>
    %14 = vector.shape_cast %13 : vector<2x256xf32> to vector<2x2x128xf32>
    %cst_6 = arith.constant dense<0.000000e+00> : vector<128xf32>
    %15 = vector.multi_reduction <add>, %14, %cst_6 [0, 1] : vector<2x2x128xf32> to vector<128xf32>
    %16 = vector.shape_cast %15 : vector<128xf32> to vector<1x1x128xf32>
    %17 = vector.shape_cast %7 : vector<2x256xf32> to vector<2x2x128xf32>
    %cst_7 = arith.constant dense<0.000000e+00> : vector<128xf32>
    %18 = vector.multi_reduction <add>, %17, %cst_7 [0, 1] : vector<2x2x128xf32> to vector<128xf32>
    %19 = vector.shape_cast %18 : vector<128xf32> to vector<1x1x128xf32>
    %20 = vector.shape_cast %16 : vector<1x1x128xf32> to vector<1x1x1x128xf32>
    %c0_8 = arith.constant 0 : index
    %c0_9 = arith.constant 0 : index
    %c0_10 = arith.constant 0 : index
    %c0_11 = arith.constant 0 : index
    %21 = vector.load %arg4[%c0_8, %c0_9, %c0_10, %c0_11] : memref<1x1x1x128xf32, #tpu.memory_space<vmem>>, vector<1x1x1x128xf32>
    tpu.vector_store %arg4[%c0_8, %c0_9, %c0_10, %c0_11], %20 {strides = array<i32>} : memref<1x1x1x128xf32, #tpu.memory_space<vmem>>, vector<1x1x1x128xf32>,
    %22 = arith.fptosi %19 : vector<1x1x128xf32> to vector<1x1x128xi32>
    %23 = vector.shape_cast %22 : vector<1x1x128xi32> to vector<1x1x1x128xi32>
    %c0_12 = arith.constant 0 : index
    %c0_13 = arith.constant 0 : index
    %c0_14 = arith.constant 0 : index
    %c0_15 = arith.constant 0 : index
    %24 = vector.load %arg5[%c0_12, %c0_13, %c0_14, %c0_15] : memref<1x1x1x128xi32, #tpu.memory_space<vmem>>, vector<1x1x1x128xi32>
    tpu.vector_store %arg5[%c0_12, %c0_13, %c0_14, %c0_15], %23 {strides = array<i32>} : memref<1x1x1x128xi32, #tpu.memory_space<vmem>>, vector<1x1x1x128xi32>,
    return
  }
  func.func @transform_0(%arg0: i32, %arg1: i32) -> (i32, i32, i32) {
    %c0_i32 = arith.constant 0 : i32
    %c0_i32_0 = arith.constant 0 : i32
    return %arg0, %c0_i32, %arg1 : i32, i32, i32
  }
  func.func @transform_1(%arg0: i32, %arg1: i32) -> (i32, i32, i32) {
    %c0_i32 = arith.constant 0 : i32
    %c0_i32_0 = arith.constant 0 : i32
    return %arg0, %c0_i32, %arg1 : i32, i32, i32
  }
  func.func @transform_2(%arg0: i32, %arg1: i32) -> (i32, i32, i32, i32) {
    %c0_i32 = arith.constant 0 : i32
    %c0_i32_0 = arith.constant 0 : i32
    %c0_i32_1 = arith.constant 0 : i32
    return %arg0, %arg1, %c0_i32, %c0_i32_0 : i32, i32, i32, i32
  }
  func.func @transform_3(%arg0: i32, %arg1: i32) -> (i32, i32, i32, i32) {
    %c0_i32 = arith.constant 0 : i32
    %c0_i32_0 = arith.constant 0 : i32
    %c0_i32_1 = arith.constant 0 : i32
    return %arg0, %arg1, %c0_i32, %c0_i32_0 : i32, i32, i32, i32
  }
}

</mosaic_0001>

<llo_original>
// kernel: tpu_custom_call.1
$region0: #{tpu_custom_call.1}
  #allocation0 [shape = 'u32[]', space=smem, size = 0x4, offset = 0x4, fixed_abs, tag = 'smem constant byte address 0x4 - core index']
  #allocation1 [shape = 'u32[144,128]{1,0:T(1,128)}', space=vmem, size = 0x12000, scoped, tag = 'internal scratch']
  %s0 = inlined_call_operand.hbm [shape: f32[2,4,256], index: 0, kind: input, shape index: {}]
  %s1 = inlined_call_operand.hbm [shape: f32[2,4,256], index: 1, kind: input, shape index: {}]
  %s2 = inlined_call_operand.hbm [shape: f32[1,1,1,128], index: 2, kind: output, shape index: {0}]
  %s3 = inlined_call_operand.hbm [shape: s32[1,1,1,128], index: 3, kind: output, shape index: {1}]
  %4 = xla_tuple %s2, %s3
  %s5 = sld [smem:[#allocation0]]
  $region34: #{tpu_custom_call.1} parent=0
    _
  %s7 = ssub.s32 1, %s5
  %s8 = scalar_select 0, %s7, %s5
  $region1: #{tpu_custom_call.1} parent=0
    #allocation2 [shape = 'u8[8192]{0}', space=vmem, size = 0x2000, scoped, tag = 'input window, operand 0, single buffered']
    #allocation3 [shape = 's32[1]{0}', space=sflag, size = 0x4, scoped, tag = 'scoped memory for tpu_custom_call.1']
    #allocation4 [shape = 's32[1]{0}', space=sflag, size = 0x4, scoped, tag = 'scoped memory for tpu_custom_call.1']
    #allocation5 [shape = 'u8[8192]{0}', space=vmem, size = 0x2000, scoped, tag = 'input window, operand 1, single buffered']
    #allocation6 [shape = 's32[1]{0}', space=sflag, size = 0x4, scoped, tag = 'scoped memory for tpu_custom_call.1']
    #allocation7 [shape = 'u8[512]{0}', space=vmem, size = 0x400, scoped, tag = 'output window, operand 0, single buffered']
    #allocation8 [shape = 'u8[512]{0}', space=vmem, size = 0x400, scoped, tag = 'output window, operand 1, single buffered']
    #allocation9 [shape = 's32[1]{0}', space=sflag, size = 0x4, scoped, tag = 'scoped memory for tpu_custom_call.1']
    %9 = vsyncpa [#allocation3], 0
    %10 = vsyncpa [#allocation6], 0
    %11 = vsyncpa [#allocation4], 0
    %12 = vsyncpa [#allocation9], 0
    // Predicated region
    $region2: #{tpu_custom_call.1} parent=1 // pred_check
      _
    $region3: #{tpu_custom_call.1} parent=1 // pred_check_branch
      %14 = sbr.rel (0) target = $region5
    $region4: #{tpu_custom_call.1} parent=1 // pred_region
      %s16 = ssub.s32 256, 256
      %17 = vsyncadd [#allocation3], %s16
      %s18 = sshll.u32 [#allocation2], 4
      %s19 = int_to_ptr.vmem [resolvable:$true] %s18
      %24 = dma.hbm_to_vmem [thread:$0]  %s0, 256, %s19, [#allocation3], 128, 128, 8
    $region5: #{tpu_custom_call.1} parent=1 // pred_fallthru
      _
    // Predicated region
    $region6: #{tpu_custom_call.1} parent=1 // pred_check
      _
    $region7: #{tpu_custom_call.1} parent=1 // pred_check_branch
      %26 = sbr.rel (0) target = $region9
    $region8: #{tpu_custom_call.1} parent=1 // pred_region
      %s28 = ssub.s32 256, 256
      %29 = vsyncadd [#allocation6], %s28
      %s30 = sshll.u32 [#allocation5], 4
      %s31 = int_to_ptr.vmem [resolvable:$true] %s30
      %36 = dma.hbm_to_vmem [thread:$0]  %s1, 256, %s31, [#allocation6], 128, 128, 8
    $region9: #{tpu_custom_call.1} parent=1 // pred_fallthru
      _
    // Predicated region
    $region10: #{tpu_custom_call.1} parent=1 // pred_check
      _
    $region11: #{tpu_custom_call.1} parent=1 // pred_check_branch
      %38 = sbr.rel (0) target = $region13
    $region12: #{tpu_custom_call.1} parent=1 // pred_region
      %39 = dma.done [#allocation3], 256
    $region13: #{tpu_custom_call.1} parent=1 // pred_fallthru
      _
    // Predicated region
    $region14: #{tpu_custom_call.1} parent=1 // pred_check
      _
    $region15: #{tpu_custom_call.1} parent=1 // pred_check_branch
      %41 = sbr.rel (0) target = $region17
    $region16: #{tpu_custom_call.1} parent=1 // pred_region
      %42 = dma.done [#allocation6], 256
    $region17: #{tpu_custom_call.1} parent=1 // pred_fallthru
      _
    %v43 = vld [vmem:[#allocation5] sm:$0xff]
    %v44 = vld [vmem:[#allocation5 + $0x8] sm:$0xff]
    %v45 = vld [vmem:[#allocation2] sm:$0xff]
    %v46 = vld [vmem:[#allocation2 + $0x8] sm:$0xff]
    %vm47 = vcmp.ne.f32.partialorder %v43, 0.0
    %vm48 = vcmp.ne.f32.partialorder %v44, 0.0
    %v49 = vsel %vm47, 1, 0
    %v50 = vsel %vm48, 1, 0
    %v51 = vcvt.s32.f32 %v49
    %v52 = vcvt.s32.f32 %v50
    %v53 = vsub.f32 %v43, %v45
    %v54 = vsub.f32 %v44, %v46
    %v55 = vmul.f32 %v53, %v53
    %v56 = vmul.f32 %v54, %v54
    %v59 = vcombine.high %v55, %v55
    %v60 = vcombine.high %v56, %v56
    %v61 = vrot.slane %v55, 1
    %v62 = vrot.slane %v59, 1
    %v63 = vrot.slane %v56, 1
    %v64 = vrot.slane %v60, 1
    %vm69 = vcmask 1042432
    %v70 = vsel %vm69, %v61, 0.0
    %v71 = vrot.slane %v70, 4
    %v72 = vadd.f32 %v70, %v71
    %v73 = vrot.slane %v72, 2
    %v74 = vadd.f32 %v72, %v73
    %v75 = vrot.slane %v74, 1
    %v76 = vadd.f32 %v74, %v75
    %v77 = vsel %vm69, %v62, 0.0
    %v78 = vrot.slane %v77, 4
    %v79 = vadd.f32 %v77, %v78
    %v80 = vrot.slane %v79, 2
    %v81 = vadd.f32 %v79, %v80
    %v82 = vrot.slane %v81, 1
    %v83 = vadd.f32 %v81, %v82
    %v84 = vsel %vm69, %v63, 0.0
    %v85 = vrot.slane %v84, 4
    %v86 = vadd.f32 %v84, %v85
    %v87 = vrot.slane %v86, 2
    %v88 = vadd.f32 %v86, %v87
    %v89 = vrot.slane %v88, 1
    %v90 = vadd.f32 %v88, %v89
    %v91 = vsel %vm69, %v64, 0.0
    %v92 = vrot.slane %v91, 4
    %v93 = vadd.f32 %v91, %v92
    %v94 = vrot.slane %v93, 2
    %v95 = vadd.f32 %v93, %v94
    %v96 = vrot.slane %v95, 1
    %v97 = vadd.f32 %v95, %v96
    %v102 = vcombine.low %v76, %v83
    %v103 = vcombine.low %v90, %v97
    %v106 = vmul.f32 %v51, %v102
    %v107 = vmul.f32 %v52, %v103
    %v110 = vrot.slane %v106, 4
    %v111 = vrot.slane %v107, 4
    %v112 = vrot.slane %v107, 7
    %vm113 = vcmask 1041409
    %v114 = vsel %vm113, %v112, %v106
    %vm115 = vcmask 1045509
    %v116 = vsel %vm115, %v112, %v114
    %v117 = vrot.slane %v111, 7
    %v118 = vsel %vm113, %v117, %v110
    %v119 = vsel %vm115, %v117, %v118
    %v122 = vcombine.low %v116, %v119
    %v124 = vunpack.c.l.s4 1934713408
    %v125 = vunpack.c.0.s8 %v124
    %v126 = vlaneseq
    %v127 = vshrl.u32 %v126, 7
    %v128 = vsub.s32 %v125, %v127
    %v129 = vrot.slane %v122, %v128
    %v130 = vcombine.high %v129, 0.0
    %vm131 = vcmask 1041408
    %v132 = vsel %vm131, %v129, 0.0
    %v133 = vsel %vm131, %v130, 0.0
    %v134 = vadd.f32 %v132, %v133
    %v135 = vrot.slane %v134, 4
    %v136 = vadd.f32 %v134, %v135
    %v137 = vrot.slane %v136, 2
    %v138 = vadd.f32 %v136, %v137
    %v139 = vrot.slane %v138, 1
    %v140 = vadd.f32 %v138, %v139
    %v143 = vrot.slane %v51, 4
    %v144 = vrot.slane %v52, 4
    %v145 = vrot.slane %v52, 7
    %v146 = vsel %vm113, %v145, %v51
    %v147 = vsel %vm115, %v145, %v146
    %v148 = vrot.slane %v144, 7
    %v149 = vsel %vm113, %v148, %v143
    %v150 = vsel %vm115, %v148, %v149
    %v153 = vcombine.low %v147, %v150
    %v155 = vunpack.c.l.s4 1934713408
    %v156 = vunpack.c.0.s8 %v155
    %v157 = vlaneseq
    %v158 = vshrl.u32 %v157, 7
    %v159 = vsub.s32 %v156, %v158
    %v160 = vrot.slane %v153, %v159
    %v161 = vcombine.high %v160, 0.0
    %v162 = vsel %vm131, %v160, 0.0
    %v163 = vsel %vm131, %v161, 0.0
    %v164 = vadd.f32 %v162, %v163
    %v165 = vrot.slane %v164, 4
    %v166 = vadd.f32 %v164, %v165
    %v167 = vrot.slane %v166, 2
    %v168 = vadd.f32 %v166, %v167
    %v169 = vrot.slane %v168, 1
    %v170 = vadd.f32 %v168, %v169
    %171 = vst [vmem:[#allocation7] sm:$0x1] %v140
    %v172 = vcvt.f32.s32.to.zero.pseudo %v170
    %173 = vst [vmem:[#allocation8] sm:$0x1] %v172
    // Predicated region
    $region18: #{tpu_custom_call.1} parent=1 // pred_check
      _
    $region19: #{tpu_custom_call.1} parent=1 // pred_check_branch
      %175 = sbr.rel (0) target = $region21
    $region20: #{tpu_custom_call.1} parent=1 // pred_region
      %s177 = ssub.s32 16, 16
      %178 = vsyncadd [#allocation4], %s177
      %s180 = sshll.u32 [#allocation7], 4
      %s181 = int_to_ptr.vmem [resolvable:$true] %s180
      %183 = dma.vmem_to_hbm [thread:$0]  %s181, 16, %s2, [#allocation4]
    $region21: #{tpu_custom_call.1} parent=1 // pred_fallthru
      _
    // Predicated region
    $region22: #{tpu_custom_call.1} parent=1 // pred_check
      _
    $region23: #{tpu_custom_call.1} parent=1 // pred_check_branch
      %185 = sbr.rel (0) target = $region25
    $region24: #{tpu_custom_call.1} parent=1 // pred_region
      %s187 = ssub.s32 16, 16
      %188 = vsyncadd [#allocation9], %s187
      %s190 = sshll.u32 [#allocation8], 4
      %s191 = int_to_ptr.vmem [resolvable:$true] %s190
      %193 = dma.vmem_to_hbm [thread:$0]  %s191, 16, %s3, [#allocation9]
    $region25: #{tpu_custom_call.1} parent=1 // pred_fallthru
      _
    // Predicated region
    $region26: #{tpu_custom_call.1} parent=1 // pred_check
      _
    $region27: #{tpu_custom_call.1} parent=1 // pred_check_branch
      %195 = sbr.rel (0) target = $region29
    $region28: #{tpu_custom_call.1} parent=1 // pred_region
      %196 = dma.done [#allocation4], 16
    $region29: #{tpu_custom_call.1} parent=1 // pred_fallthru
      _
    // Predicated region
    $region30: #{tpu_custom_call.1} parent=1 // pred_check
      _
    $region31: #{tpu_custom_call.1} parent=1 // pred_check_branch
      %198 = sbr.rel (0) target = $region33
    $region32: #{tpu_custom_call.1} parent=1 // pred_region
      %199 = dma.done [#allocation9], 16
    $region33: #{tpu_custom_call.1} parent=1 // pred_fallthru
      _
    %200 = vsyncpa [#allocation3], 1
    %201 = vsyncpa [#allocation6], 1
    %202 = vsyncpa [#allocation4], 1
    %203 = vsyncpa [#allocation9], 1

</llo_original>
